<compile_context>
chip_gen: v5e
topology: v5e:2x2
jax: 0.10.0
libtpu: 0.0.40
codegen_flags: <defaults>
</compile_context>

<pallas_src>
import math

import jax
import jax.numpy as jnp
from jax.experimental import pallas as pl
from jax.experimental.pallas import tpu as pltpu

A_DIM = 6            # action_dim
HID = 128            # hidden width used everywhere in the torch module
SEQ = 8              # state_dim[1]; the forward's shape algebra requires L == 8
N_CH = 6             # state_dim[0]
K1 = 4               # first conv kernel size
K2 = 5               # second conv kernel size
CONV_P = SEQ - K1 + 1          # 5 positions after the first conv
IN_W = N_CH * SEQ              # 48 = flattened per-row input width
MERGE_W = 6 * HID              # 768 = merged branch width
NEG_PAD = -1e30                # pad-lane bias so softmax pad probability is exactly 0


# --------------------------------- Pallas kernel -----------------------------------
def actor_kernel(xin_ref, w0_ref, b0_ref, w1_ref, b1_ref, w2_ref, b2_ref, out_ref):
    f32 = jnp.float32
    bf16 = jnp.bfloat16

    xin = xin_ref[...].astype(bf16)                                      # [N, 48]

    # Stage 1: all six branches (fc1/fc2/fc3, fused conv1/conv2, conv3) as ONE
    # block-diagonal affine map + ReLU -> merged slab (torch.cat order baked in).
    merged = jnp.dot(xin, w0_ref[...], preferred_element_type=f32) + b0_ref[...]
    merged = jnp.maximum(merged, 0.0)                                    # [N, 768] f32

    # Stage 2: Linear(768,128) + ReLU.
    h = jnp.dot(merged.astype(bf16), w1_ref[...],
                preferred_element_type=f32) + b1_ref[...]
    h = jnp.maximum(h, 0.0)                                              # [N, 128] f32

    # Stage 3: Linear(128,6) zero-padded to 128 lanes; pad-lane biases are -1e30 so
    # exp() underflows to exactly 0 and the 128-wide softmax equals the 6-wide one.
    logits = jnp.dot(h.astype(bf16), w2_ref[...],
                     preferred_element_type=f32) + b2_ref[...]           # [N, 128] f32
    m = jnp.max(logits, axis=1, keepdims=True)
    e = jnp.exp(logits - m)
    denom = jnp.sum(e, axis=1, keepdims=True)
    out_ref[...] = e * pl.reciprocal(denom)      # exact reciprocal, multiply not divide


# --------------------------------- wrapper ------------------------------------------
def _default_block_n(n):
    # Per-row working set is a few KB and weights (~0.3 MB bf16) stay VMEM-resident.
    # Small/latency batches: single sublane-aligned block (no padding to 128).
    if n <= 256:
        return max(8, ((n + 7) // 8) * 8)
    # Batch path: cap at 1024 and keep >= 2 grid steps so both v7x TensorCores work.
    # Sweep per generation: 1024-2048 on v5e/v6e (128 MiB VMEM), 512-1024 on v7x.
    half = (((n + 1) // 2) + 7) // 8 * 8
    return min(1024, max(256, half))


def actor_forward(x, kp, *, block_n=None):
    """x: [N, 6, 8] f32; kp: fused kernel params.  Returns [N, A_DIM] softmax probs."""
    N = x.shape[0]
    assert x.shape[1:] == (N_CH, SEQ), "ActorNetwork forward requires state shape [N,6,8]"

    if block_n is None:
        block_n = _default_block_n(N)
    block_n = max(8, ((block_n + 7) // 8) * 8)           # sublane-aligned
    n_blocks = max(1, pl.cdiv(N, block_n))
    n_pad = n_blocks * block_n

    xin = x.reshape(N, IN_W)                             # free reshape -> one DMA/row
    if n_pad != N:
        xin = jnp.pad(xin, ((0, n_pad - N), (0, 0)))

    weights = (kp['w0'], kp['b0'], kp['w1'], kp['b1'], kp['w2'], kp['b2'])

    def w_spec(a):
        return pl.BlockSpec(a.shape, lambda i: (0,) * a.ndim)   # resident weights

    out = pl.pallas_call(
        actor_kernel,
        out_shape=jax.ShapeDtypeStruct((n_pad, HID), jnp.float32),   # lane-dense output
        grid_spec=pltpu.PrefetchScalarGridSpec(
            num_scalar_prefetch=0,
            grid=(n_blocks,),
            in_specs=[pl.BlockSpec((block_n, IN_W), lambda i: (i, 0))]
                     + [w_spec(a) for a in weights],
            out_specs=pl.BlockSpec((block_n, HID), lambda i: (i, 0))),
        compiler_params=pltpu.CompilerParams(
            dimension_semantics=("parallel",)),
    )(xin, *weights)
    return out[:N, :A_DIM]


# ---------------- deterministic parameter setup (PyTorch default-style init) --------
def init_torch_layout_params(key):
    ks = iter(jax.random.split(key, 20))

    def uni(shape, fan_in):
        b = 1.0 / math.sqrt(fan_in)
        return jax.random.uniform(next(ks), shape, jnp.float32, -b, b)

    p = {}
    p['fc1_w'] = uni((HID, 1), 1);              p['fc1_b'] = uni((HID,), 1)
    p['fc2_w'] = uni((HID, 1), 1);              p['fc2_b'] = uni((HID,), 1)
    p['fc3_w'] = uni((HID, 1), 1);              p['fc3_b'] = uni((HID,), 1)
    p['c1a_w'] = uni((HID, 1, K1), K1);         p['c1a_b'] = uni((HID,), K1)
    p['c1b_w'] = uni((HID, HID, K2), HID * K2); p['c1b_b'] = uni((HID,), HID * K2)
    p['c2a_w'] = uni((HID, 1, K1), K1);         p['c2a_b'] = uni((HID,), K1)
    p['c2b_w'] = uni((HID, HID, K2), HID * K2); p['c2b_b'] = uni((HID,), HID * K2)
    p['c3_w'] = uni((HID, 1, A_DIM), A_DIM);    p['c3_b'] = uni((HID,), A_DIM)
    p['o1_w'] = uni((HID, HID * 6), HID * 6);   p['o1_b'] = uni((HID,), HID * 6)
    p['o2_w'] = uni((A_DIM, HID), HID);         p['o2_b'] = uni((A_DIM,), HID)
    return p


def to_kernel_params(tp):
    """Fuse / pre-transpose weights (all fusion math in f32; cast to bf16 once)."""
    f32, bf16 = jnp.float32, jnp.bfloat16

    def fuse_conv_branch(wa, ba, wb, bb):
        # Conv1d(1,128,4) followed (NO ReLU in between, per the nn.Sequential spec) by
        # Conv1d(128,128,5) over a length-8 input is a single affine map R^8 -> R^128:
        #   Wc[j,o] = sum_{c,q,t : q+t=j} wa[c,0,t] * wb[o,c,q]
        #   bc[o]   = sum_{c,q} wb[o,c,q] * ba[c] + bb[o]
        w4 = wa[:, 0, :].T                                    # [4, 128]
        T = jnp.zeros((SEQ, CONV_P, HID), f32)
        for q in range(CONV_P):
            T = T.at[q:q + K1, q, :].set(w4)                  # T[j,q,c] = wa[c,0,j-q]
        Wc = jnp.einsum('jqc,ocq->jo', T, wb)                 # [8, 128]
        bc = jnp.einsum('c,ocq->o', ba, wb) + bb              # [128]
        return Wc, bc

    wc1, bc1 = fuse_conv_branch(tp['c1a_w'], tp['c1a_b'], tp['c1b_w'], tp['c1b_b'])
    wc2, bc2 = fuse_conv_branch(tp['c2a_w'], tp['c2a_b'], tp['c2b_w'], tp['c2b_b'])

    # Block-diagonal stage-1 weight: flat input index = channel*8 + position.
    w0 = jnp.zeros((IN_W, MERGE_W), f32)
    w0 = w0.at[0 * SEQ + SEQ - 1, 0 * HID:1 * HID].set(tp['fc1_w'][:, 0])       # ch0[-1]
    w0 = w0.at[1 * SEQ + SEQ - 1, 1 * HID:2 * HID].set(tp['fc2_w'][:, 0])       # ch1[-1]
    w0 = w0.at[2 * SEQ:3 * SEQ, 2 * HID:3 * HID].set(wc1)                       # ch2 conv
    w0 = w0.at[3 * SEQ:4 * SEQ, 3 * HID:4 * HID].set(wc2)                       # ch3 conv
    w0 = w0.at[4 * SEQ:4 * SEQ + A_DIM, 4 * HID:5 * HID].set(tp['c3_w'][:, 0, :].T)  # ch4[:6]
    w0 = w0.at[5 * SEQ + SEQ - 1, 5 * HID:6 * HID].set(tp['fc3_w'][:, 0])       # ch5[-1]
    b0 = jnp.concatenate([tp['fc1_b'], tp['fc2_b'], bc1, bc2,
                          tp['c3_b'], tp['fc3_b']])[None, :]                    # [1,768]

    # Output head: Linear(768,128), then Linear(128,6) padded lane-dense to 128.
    w2p = jnp.zeros((HID, HID), f32).at[:, :A_DIM].set(tp['o2_w'].T)
    b2p = jnp.full((1, HID), NEG_PAD, f32).at[0, :A_DIM].set(tp['o2_b'])

    return {'w0': w0.astype(bf16), 'b0': b0.astype(f32),
            'w1': tp['o1_w'].T.astype(bf16), 'b1': tp['o1_b'][None, :].astype(f32),
            'w2': w2p.astype(bf16), 'b2': b2p.astype(f32)}


# ---------------- pure-JAX references ------------------------------------------------
def reference_forward_f32(x, tp):
    """Mirrors the PyTorch forward exactly, all f32 (no fusion, real convs)."""
    relu = lambda z: jnp.maximum(z, 0.0)

    def lin(v, w, b):                  # v: [N, in], w: [out, in]
        return v @ w.T + b

    def conv1d(u, w, b):               # u: [N,Cin,L], w: [Cout,Cin,K] (NCW, valid)
        y = jax.lax.conv_general_dilated(u, w, (1,), 'VALID',
                                         dimension_numbers=('NCH', 'OIH', 'NCH'))
        return y + b[None, :, None]

    N = x.shape[0]
    s0 = relu(lin(x[:, 0:1, -1], tp['fc1_w'], tp['fc1_b']))
    s1 = relu(lin(x[:, 1:2, -1], tp['fc2_w'], tp['fc2_b']))
    s2 = relu(conv1d(conv1d(x[:, 2:3, :], tp['c1a_w'], tp['c1a_b']),
                     tp['c1b_w'], tp['c1b_b'])).reshape(N, -1)
    s3 = relu(conv1d(conv1d(x[:, 3:4, :], tp['c2a_w'], tp['c2a_b']),
                     tp['c2b_w'], tp['c2b_b'])).reshape(N, -1)
    s4 = relu(conv1d(x[:, 4:5, :A_DIM], tp['c3_w'], tp['c3_b'])).reshape(N, -1)
    s5 = relu(lin(x[:, 5:6, -1], tp['fc3_w'], tp['fc3_b']))
    merged = jnp.concatenate([s0, s1, s2, s3, s4, s5], axis=1)
    h = relu(merged @ tp['o1_w'].T + tp['o1_b'])
    logits = h @ tp['o2_w'].T + tp['o2_b']
    return jax.nn.softmax(logits, axis=1)


def reference_forward_kernel_numerics(x, kp):
    """Exact plain-JAX mirror of the Pallas kernel math (bf16 MXU operands, f32 acc)."""
    f32, bf16 = jnp.float32, jnp.bfloat16
    xin = x.reshape(x.shape[0], IN_W).astype(bf16)
    merged = jnp.maximum(jnp.dot(xin, kp['w0'], preferred_element_type=f32)
                         + kp['b0'], 0.0)
    h = jnp.maximum(jnp.dot(merged.astype(bf16), kp['w1'], preferred_element_type=f32)
                    + kp['b1'], 0.0)
    logits = (jnp.dot(h.astype(bf16), kp['w2'], preferred_element_type=f32) + kp['b2'])
    m = jnp.max(logits, axis=1, keepdims=True)
    e = jnp.exp(logits - m)
    p = e * (1.0 / jnp.sum(e, axis=1, keepdims=True))
    return p[:, :A_DIM]


if __name__ == "__main__":
    key = jax.random.PRNGKey(0)
    kx, kx2, kp_key = jax.random.split(key, 3)

    torch_params = init_torch_layout_params(kp_key)
    kernel_params = to_kernel_params(torch_params)

    # ---- small / latency-path batch (single 8-row block, no padding to 128) --------
    batch = 2
    x = jax.random.normal(kx, (batch, N_CH, SEQ), jnp.float32)   # [N, 6, 8]
    out = jax.block_until_ready(actor_forward(x, kernel_params))

    assert out.shape == (batch, A_DIM)
    assert bool(jnp.allclose(jnp.sum(out, axis=1), 1.0, atol=1e-5)), \
        "softmax rows must sum to 1"

    # Tight check against a plain-JAX mirror of the same fused bf16-MXU computation
    # (catches layout / block-diagonal / conv-fusion bugs).
    ref_bf16 = reference_forward_kernel_numerics(x, kernel_params)
    assert bool(jnp.allclose(out, ref_bf16, atol=1e-4, rtol=1e-4)), \
        "mismatch vs bf16-mirrored JAX reference"

    # Loose sanity check against the pure-f32 PyTorch-style forward (difference is
    # only bf16 rounding of MXU operands; the conv fusion itself is exact algebra).
    ref_f32 = reference_forward_f32(x, torch_params)
    assert bool(jnp.allclose(out, ref_f32, atol=5e-2)), \
        "mismatch vs f32 PyTorch-style reference"

    # ---- multi-block batch path (exercises the parallel grid + padding) ------------
    batch2 = 300
    x2 = jax.random.normal(kx2, (batch2, N_CH, SEQ), jnp.float32)
    out2 = jax.block_until_ready(actor_forward(x2, kernel_params))
    assert out2.shape == (batch2, A_DIM)
    assert bool(jnp.allclose(jnp.sum(out2, axis=1), 1.0, atol=1e-5))
    ref2 = reference_forward_kernel_numerics(x2, kernel_params)
    assert bool(jnp.allclose(out2, ref2, atol=1e-4, rtol=1e-4)), \
        "multi-block mismatch vs bf16-mirrored JAX reference"

    print("KERNEL_OK")
</pallas_src>

<mosaic_0001>
module attributes {stable_mosaic.version = 11 : i64} {
  func.func @actor_kernel(%arg0: i32, %arg1: memref<8x48xf32, #tpu.memory_space<vmem>>, %arg2: memref<48x768xbf16, #tpu.memory_space<vmem>>, %arg3: memref<1x768xf32, #tpu.memory_space<vmem>>, %arg4: memref<768x128xbf16, #tpu.memory_space<vmem>>, %arg5: memref<1x128xf32, #tpu.memory_space<vmem>>, %arg6: memref<128x128xbf16, #tpu.memory_space<vmem>>, %arg7: memref<1x128xf32, #tpu.memory_space<vmem>>, %arg8: memref<8x128xf32, #tpu.memory_space<vmem>>) attributes {dimension_semantics = [#tpu.dimension_semantics<parallel>], iteration_bounds = array<i64: 1>, scalar_prefetch = 0 : i64, scratch_operands = 0 : i64, tpu.core_type = #tpu.core_type<tc>, window_params = [{transform_indices = @transform_0, window_bounds = array<i64: 8, 48>}, {pipeline_mode = #tpu.pipeline_mode<synchronous>, transform_indices = @transform_1, window_bounds = array<i64: 48, 768>}, {pipeline_mode = #tpu.pipeline_mode<synchronous>, transform_indices = @transform_2, window_bounds = array<i64: 1, 768>}, {pipeline_mode = #tpu.pipeline_mode<synchronous>, transform_indices = @transform_3, window_bounds = array<i64: 768, 128>}, {pipeline_mode = #tpu.pipeline_mode<synchronous>, transform_indices = @transform_4, window_bounds = array<i64: 1, 128>}, {pipeline_mode = #tpu.pipeline_mode<synchronous>, transform_indices = @transform_5, window_bounds = array<i64: 128, 128>}, {pipeline_mode = #tpu.pipeline_mode<synchronous>, transform_indices = @transform_6, window_bounds = array<i64: 1, 128>}, {transform_indices = @transform_7, window_bounds = array<i64: 8, 128>}]} {
    %c0 = arith.constant 0 : index
    %c0_0 = arith.constant 0 : index
    %0 = vector.load %arg1[%c0, %c0_0] : memref<8x48xf32, #tpu.memory_space<vmem>>, vector<8x48xf32>
    %1 = arith.truncf %0 : vector<8x48xf32> to vector<8x48xbf16>
    %c0_1 = arith.constant 0 : index
    %c0_2 = arith.constant 0 : index
    %2 = vector.load %arg2[%c0_1, %c0_2] : memref<48x768xbf16, #tpu.memory_space<vmem>>, vector<48x768xbf16>
    %cst = arith.constant dense<0.000000e+00> : vector<8x768xf32>
    %3 = tpu.matmul %1, %2, %cst {dimension_numbers = #tpu.dot_dimension_numbers<[1], [0], [0], [1], [0, 0, 1, 1], [], []>} : vector<8x48xbf16>, vector<48x768xbf16>, vector<8x768xf32> -> vector<8x768xf32>
    %c0_3 = arith.constant 0 : index
    %c0_4 = arith.constant 0 : index
    %4 = vector.load %arg3[%c0_3, %c0_4] : memref<1x768xf32, #tpu.memory_space<vmem>>, vector<1x768xf32>
    %5 = vector.broadcast %4 : vector<1x768xf32> to vector<8x768xf32>
    %6 = arith.addf %3, %5 : vector<8x768xf32>
    %cst_5 = arith.constant 0.000000e+00 : f32
    %7 = vector.broadcast %cst_5 : f32 to vector<8x768xf32>
    %8 = arith.maximumf %6, %7 : vector<8x768xf32>
    %9 = arith.truncf %8 : vector<8x768xf32> to vector<8x768xbf16>
    %c0_6 = arith.constant 0 : index
    %c0_7 = arith.constant 0 : index
    %10 = vector.load %arg4[%c0_6, %c0_7] : memref<768x128xbf16, #tpu.memory_space<vmem>>, vector<768x128xbf16>
    %cst_8 = arith.constant dense<0.000000e+00> : vector<8x128xf32>
    %11 = tpu.matmul %9, %10, %cst_8 {dimension_numbers = #tpu.dot_dimension_numbers<[1], [0], [0], [1], [0, 0, 1, 1], [], []>} : vector<8x768xbf16>, vector<768x128xbf16>, vector<8x128xf32> -> vector<8x128xf32>
    %c0_9 = arith.constant 0 : index
    %c0_10 = arith.constant 0 : index
    %12 = vector.load %arg5[%c0_9, %c0_10] : memref<1x128xf32, #tpu.memory_space<vmem>>, vector<1x128xf32>
    %13 = vector.broadcast %12 : vector<1x128xf32> to vector<8x128xf32>
    %14 = arith.addf %11, %13 : vector<8x128xf32>
    %cst_11 = arith.constant 0.000000e+00 : f32
    %15 = vector.broadcast %cst_11 : f32 to vector<8x128xf32>
    %16 = arith.maximumf %14, %15 : vector<8x128xf32>
    %17 = arith.truncf %16 : vector<8x128xf32> to vector<8x128xbf16>
    %c0_12 = arith.constant 0 : index
    %c0_13 = arith.constant 0 : index
    %18 = vector.load %arg6[%c0_12, %c0_13] : memref<128x128xbf16, #tpu.memory_space<vmem>>, vector<128x128xbf16>
    %cst_14 = arith.constant dense<0.000000e+00> : vector<8x128xf32>
    %19 = tpu.matmul %17, %18, %cst_14 {dimension_numbers = #tpu.dot_dimension_numbers<[1], [0], [0], [1], [0, 0, 1, 1], [], []>} : vector<8x128xbf16>, vector<128x128xbf16>, vector<8x128xf32> -> vector<8x128xf32>
    %c0_15 = arith.constant 0 : index
    %c0_16 = arith.constant 0 : index
    %20 = vector.load %arg7[%c0_15, %c0_16] : memref<1x128xf32, #tpu.memory_space<vmem>>, vector<1x128xf32>
    %21 = vector.broadcast %20 : vector<1x128xf32> to vector<8x128xf32>
    %22 = arith.addf %19, %21 : vector<8x128xf32>
    %cst_17 = arith.constant dense<0xFF800000> : vector<8xf32>
    %23 = vector.multi_reduction <maximumf>, %22, %cst_17 [1] : vector<8x128xf32> to vector<8xf32>
    %24 = vector.shape_cast %23 : vector<8xf32> to vector<8x1xf32>
    %25 = vector.broadcast %24 : vector<8x1xf32> to vector<8x128xf32>
    %26 = arith.subf %22, %25 : vector<8x128xf32>
    %27 = math.exp %26 : vector<8x128xf32>
    %cst_18 = arith.constant dense<0.000000e+00> : vector<8xf32>
    %28 = vector.multi_reduction <add>, %27, %cst_18 [1] : vector<8x128xf32> to vector<8xf32>
    %29 = vector.shape_cast %28 : vector<8xf32> to vector<8x1xf32>
    %30 = tpu.reciprocal %29 : vector<8x1xf32> -> vector<8x1xf32>
    %31 = vector.broadcast %30 : vector<8x1xf32> to vector<8x128xf32>
    %32 = arith.mulf %27, %31 : vector<8x128xf32>
    %c0_19 = arith.constant 0 : index
    %c0_20 = arith.constant 0 : index
    %33 = vector.load %arg8[%c0_19, %c0_20] : memref<8x128xf32, #tpu.memory_space<vmem>>, vector<8x128xf32>
    tpu.vector_store %arg8[%c0_19, %c0_20], %32 {strides = array<i32>} : memref<8x128xf32, #tpu.memory_space<vmem>>, vector<8x128xf32>,
    return
  }
  func.func @transform_0(%arg0: i32) -> (i32, i32) {
    %c0_i32 = arith.constant 0 : i32
    %c0_i32_0 = arith.constant 0 : i32
    return %arg0, %c0_i32 : i32, i32
  }
  func.func @transform_1(%arg0: i32) -> (i32, i32) {
    %c0_i32 = arith.constant 0 : i32
    %c0_i32_0 = arith.constant 0 : i32
    %c0_i32_1 = arith.constant 0 : i32
    return %c0_i32, %c0_i32_0 : i32, i32
  }
  func.func @transform_2(%arg0: i32) -> (i32, i32) {
    %c0_i32 = arith.constant 0 : i32
    %c0_i32_0 = arith.constant 0 : i32
    %c0_i32_1 = arith.constant 0 : i32
    return %c0_i32, %c0_i32_0 : i32, i32
  }
  func.func @transform_3(%arg0: i32) -> (i32, i32) {
    %c0_i32 = arith.constant 0 : i32
    %c0_i32_0 = arith.constant 0 : i32
    %c0_i32_1 = arith.constant 0 : i32
    return %c0_i32, %c0_i32_0 : i32, i32
  }
  func.func @transform_4(%arg0: i32) -> (i32, i32) {
    %c0_i32 = arith.constant 0 : i32
    %c0_i32_0 = arith.constant 0 : i32
    %c0_i32_1 = arith.constant 0 : i32
    return %c0_i32, %c0_i32_0 : i32, i32
  }
  func.func @transform_5(%arg0: i32) -> (i32, i32) {
    %c0_i32 = arith.constant 0 : i32
    %c0_i32_0 = arith.constant 0 : i32
    %c0_i32_1 = arith.constant 0 : i32
    return %c0_i32, %c0_i32_0 : i32, i32
  }
  func.func @transform_6(%arg0: i32) -> (i32, i32) {
    %c0_i32 = arith.constant 0 : i32
    %c0_i32_0 = arith.constant 0 : i32
    %c0_i32_1 = arith.constant 0 : i32
    return %c0_i32, %c0_i32_0 : i32, i32
  }
  func.func @transform_7(%arg0: i32) -> (i32, i32) {
    %c0_i32 = arith.constant 0 : i32
    %c0_i32_0 = arith.constant 0 : i32
    return %arg0, %c0_i32 : i32, i32
  }
}

</mosaic_0001>

<llo_original>
// kernel: tpu_custom_call.1
$region0: #{tpu_custom_call.1}
  #allocation0 [shape = 'u32[]', space=smem, size = 0x4, offset = 0x4, fixed_abs, tag = 'smem constant byte address 0x4 - core index']
  #allocation1 [shape = 'u32[72,128]{1,0:T(1,128)}', space=vmem, size = 0x9000, scoped, tag = 'internal scratch']
  %s0 = inlined_call_operand.hbm [shape: f32[8,48], index: 0, kind: input, shape index: {}]
  %s1 = inlined_call_operand.hbm [shape: bf16[48,768], index: 1, kind: input, shape index: {}]
  %s2 = inlined_call_operand.hbm [shape: f32[1,768], index: 2, kind: input, shape index: {}]
  %s3 = inlined_call_operand.hbm [shape: bf16[768,128], index: 3, kind: input, shape index: {}]
  %s4 = inlined_call_operand.vmem [shape: f32[1,128], index: 4, kind: input, shape index: {}]
  %s5 = inlined_call_operand.hbm [shape: bf16[128,128], index: 5, kind: input, shape index: {}]
  %s6 = inlined_call_operand.vmem [shape: f32[1,128], index: 6, kind: input, shape index: {}]
  %s7 = inlined_call_operand.hbm [shape: f32[8,128], index: 7, kind: output, shape index: {}]
  %s8 = sld [smem:[#allocation0]]
  $region58: #{tpu_custom_call.1} parent=0
    _
  %s10 = ssub.s32 1, %s8
  %s11 = scalar_select 0, %s10, %s8
  $region1: #{tpu_custom_call.1} parent=0
    #allocation2 [shape = 'u8[4096]{0}', space=vmem, size = 0x1000, scoped, tag = 'input window, operand 0, single buffered']
    #allocation3 [shape = 's32[1]{0}', space=sflag, size = 0x4, scoped, tag = 'scoped memory for tpu_custom_call.1']
    #allocation4 [shape = 's32[1]{0}', space=sflag, size = 0x4, scoped, tag = 'scoped memory for tpu_custom_call.1']
    #allocation5 [shape = 'u8[73728]{0}', space=vmem, size = 0x12000, scoped, tag = 'input window, operand 1, single buffered']
    #allocation6 [shape = 's32[1]{0}', space=sflag, size = 0x4, scoped, tag = 'scoped memory for tpu_custom_call.1']
    #allocation7 [shape = 'u8[3072]{0}', space=vmem, size = 0xc00, scoped, tag = 'input window, operand 2, single buffered']
    #allocation8 [shape = 'u8[196608]{0}', space=vmem, size = 0x30000, scoped, tag = 'input window, operand 3, single buffered']
    #allocation9 [shape = 's32[1]{0}', space=sflag, size = 0x4, scoped, tag = 'scoped memory for tpu_custom_call.1']
    #allocation10 [shape = 'u8[32768]{0}', space=vmem, size = 0x8000, scoped, tag = 'input window, operand 5, single buffered']
    #allocation11 [shape = 'u8[4096]{0}', space=vmem, size = 0x1000, scoped, tag = 'output window, operand 0, single buffered']
    %12 = vsyncpa [#allocation3], 0
    %13 = vsyncpa [#allocation6], 0
    %14 = vsyncpa [#allocation9], 0
    %15 = vsyncpa [#allocation4], 0
    // Predicated region
    $region2: #{tpu_custom_call.1} parent=1 // pred_check
      _
    $region3: #{tpu_custom_call.1} parent=1 // pred_check_branch
      %17 = sbr.rel (0) target = $region5
    $region4: #{tpu_custom_call.1} parent=1 // pred_region
      %19 = vsyncadd [#allocation3], 0
      %s21 = sshll.u32 %s0, 4
      %s22 = int_to_ptr.hbm [resolvable:$true] %s21
      %s23 = sshll.u32 [#allocation2], 4
      %s24 = int_to_ptr.vmem [resolvable:$true] %s23
      %26 = dma.hbm_to_vmem [thread:$0]  %s22, 128, %s24, [#allocation3]
    $region5: #{tpu_custom_call.1} parent=1 // pred_fallthru
      _
    // Predicated region
    $region6: #{tpu_custom_call.1} parent=1 // pred_check
      _
    $region7: #{tpu_custom_call.1} parent=1 // pred_check_branch
      %28 = sbr.rel (0) target = $region9
    $region8: #{tpu_custom_call.1} parent=1 // pred_region
      %30 = vsyncadd [#allocation6], 0
      %s31 = sshll.u32 %s1, 4
      %s32 = int_to_ptr.hbm [resolvable:$true] %s31
      %s33 = sshll.u32 [#allocation5], 4
      %s34 = int_to_ptr.vmem [resolvable:$true] %s33
      %39 = dma.hbm_to_vmem [thread:$0]  %s32, 2304, %s34, [#allocation6], 384, 384, 24
    $region9: #{tpu_custom_call.1} parent=1 // pred_fallthru
      _
    // Predicated region
    $region10: #{tpu_custom_call.1} parent=1 // pred_check
      _
    $region11: #{tpu_custom_call.1} parent=1 // pred_check_branch
      %41 = sbr.rel (0) target = $region13
    $region12: #{tpu_custom_call.1} parent=1 // pred_region
      %43 = vsyncadd [#allocation6], 0
      %s45 = sshll.u32 %s2, 4
      %s46 = int_to_ptr.hbm [resolvable:$true] %s45
      %s47 = sshll.u32 [#allocation7], 4
      %s48 = int_to_ptr.vmem [resolvable:$true] %s47
      %50 = dma.hbm_to_vmem [thread:$0]  %s46, 96, %s48, [#allocation6]
    $region13: #{tpu_custom_call.1} parent=1 // pred_fallthru
      _
    // Predicated region
    $region14: #{tpu_custom_call.1} parent=1 // pred_check
      _
    $region15: #{tpu_custom_call.1} parent=1 // pred_check_branch
      %52 = sbr.rel (0) target = $region17
    $region16: #{tpu_custom_call.1} parent=1 // pred_region
      %54 = vsyncadd [#allocation9], 0
      %s55 = sshll.u32 %s3, 4
      %s56 = int_to_ptr.hbm [resolvable:$true] %s55
      %s57 = sshll.u32 [#allocation8], 4
      %s58 = int_to_ptr.vmem [resolvable:$true] %s57
      %63 = dma.hbm_to_vmem [thread:$0]  %s56, 6144, %s58, [#allocation9], 64, 64, 4
    $region17: #{tpu_custom_call.1} parent=1 // pred_fallthru
      _
    // Predicated region
    $region18: #{tpu_custom_call.1} parent=1 // pred_check
      _
    $region19: #{tpu_custom_call.1} parent=1 // pred_check_branch
      %65 = sbr.rel (0) target = $region21
    $region20: #{tpu_custom_call.1} parent=1 // pred_region
      _
    $region21: #{tpu_custom_call.1} parent=1 // pred_fallthru
      _
    // Predicated region
    $region22: #{tpu_custom_call.1} parent=1 // pred_check
      _
    $region23: #{tpu_custom_call.1} parent=1 // pred_check_branch
      %67 = sbr.rel (0) target = $region25
    $region24: #{tpu_custom_call.1} parent=1 // pred_region
      %69 = vsyncadd [#allocation9], 0
      %s70 = sshll.u32 %s5, 4
      %s71 = int_to_ptr.hbm [resolvable:$true] %s70
      %s72 = sshll.u32 [#allocation10], 4
      %s73 = int_to_ptr.vmem [resolvable:$true] %s72
      %78 = dma.hbm_to_vmem [thread:$0]  %s71, 1024, %s73, [#allocation9], 64, 64, 4
    $region25: #{tpu_custom_call.1} parent=1 // pred_fallthru
      _
    // Predicated region
    $region26: #{tpu_custom_call.1} parent=1 // pred_check
      _
    $region27: #{tpu_custom_call.1} parent=1 // pred_check_branch
      %80 = sbr.rel (0) target = $region29
    $region28: #{tpu_custom_call.1} parent=1 // pred_region
      _
    $region29: #{tpu_custom_call.1} parent=1 // pred_fallthru
      _
    // Predicated region
    $region30: #{tpu_custom_call.1} parent=1 // pred_check
      _
    $region31: #{tpu_custom_call.1} parent=1 // pred_check_branch
      %82 = sbr.rel (0) target = $region33
    $region32: #{tpu_custom_call.1} parent=1 // pred_region
      %84 = dma.done [#allocation3], 128
    $region33: #{tpu_custom_call.1} parent=1 // pred_fallthru
      _
    // Predicated region
    $region34: #{tpu_custom_call.1} parent=1 // pred_check
      _
    $region35: #{tpu_custom_call.1} parent=1 // pred_check_branch
      %86 = sbr.rel (0) target = $region37
    $region36: #{tpu_custom_call.1} parent=1 // pred_region
      %88 = dma.done [#allocation6], 2304
    $region37: #{tpu_custom_call.1} parent=1 // pred_fallthru
      _
    // Predicated region
    $region38: #{tpu_custom_call.1} parent=1 // pred_check
      _
    $region39: #{tpu_custom_call.1} parent=1 // pred_check_branch
      %90 = sbr.rel (0) target = $region41
    $region40: #{tpu_custom_call.1} parent=1 // pred_region
      %92 = dma.done [#allocation6], 96
    $region41: #{tpu_custom_call.1} parent=1 // pred_fallthru
      _
    // Predicated region
    $region42: #{tpu_custom_call.1} parent=1 // pred_check
      _
    $region43: #{tpu_custom_call.1} parent=1 // pred_check_branch
      %94 = sbr.rel (0) target = $region45
    $region44: #{tpu_custom_call.1} parent=1 // pred_region
      %96 = dma.done [#allocation9], 6144
    $region45: #{tpu_custom_call.1} parent=1 // pred_fallthru
      _
    // Predicated region
    $region46: #{tpu_custom_call.1} parent=1 // pred_check
      _
    $region47: #{tpu_custom_call.1} parent=1 // pred_check_branch
      %98 = sbr.rel (0) target = $region49
    $region48: #{tpu_custom_call.1} parent=1 // pred_region
      %100 = dma.done [#allocation9], 1024
    $region49: #{tpu_custom_call.1} parent=1 // pred_fallthru
      _
    %v102 = vld [vmem:[#allocation2] sm:$0xff]
    %v103 = vpack.c.bf16 %v102, %v102
    %v104 = vld [vmem:[#allocation5] sm:$0xff]
    %v105 = vld [vmem:[#allocation5 + $0x8] sm:$0xff]
    %v106 = vld [vmem:[#allocation5 + $0x10] sm:$0xff]
    %v107 = vld [vmem:[#allocation5 + $0x18] sm:$0xff]
    %v108 = vld [vmem:[#allocation5 + $0x20] sm:$0xff]
    %v109 = vld [vmem:[#allocation5 + $0x28] sm:$0xff]
    %v110 = vld [vmem:[#allocation5 + $0x30] sm:$0xff]
    %v111 = vld [vmem:[#allocation5 + $0x38] sm:$0xff]
    %v112 = vld [vmem:[#allocation5 + $0x40] sm:$0xff]
    %v113 = vld [vmem:[#allocation5 + $0x48] sm:$0xff]
    %v114 = vld [vmem:[#allocation5 + $0x50] sm:$0xff]
    %v115 = vld [vmem:[#allocation5 + $0x58] sm:$0xff]
    %v116 = vld [vmem:[#allocation5 + $0x60] sm:$0xff]
    %v117 = vld [vmem:[#allocation5 + $0x68] sm:$0xff]
    %v118 = vld [vmem:[#allocation5 + $0x70] sm:$0xff]
    %v119 = vld [vmem:[#allocation5 + $0x78] sm:$0xff]
    %v120 = vld [vmem:[#allocation5 + $0x80] sm:$0xff]
    %v121 = vld [vmem:[#allocation5 + $0x88] sm:$0xff]
    %v122 = vld [vmem:[#allocation7] sm:$0x3f]
    %v124 = vperm.slane %v122, 0
    %v125 = vperm.slane %v122, 1
    %v126 = vperm.slane %v122, 2
    %v127 = vperm.slane %v122, 3
    %v128 = vperm.slane %v122, 4
    %v129 = vperm.slane %v122, 5
    %v154 = vunpack.c.l.b16 %v104
    %v155 = vunpack.c.h.b16 %v104
    %v156 = vunpack.c.l.b16 %v105
    %v157 = vunpack.c.h.b16 %v105
    %v158 = vunpack.c.l.b16 %v106
    %v159 = vunpack.c.h.b16 %v106
    %v160 = vunpack.c.l.b16 %v107
    %v161 = vunpack.c.h.b16 %v107
    %v162 = vunpack.c.l.b16 %v108
    %v163 = vunpack.c.h.b16 %v108
    %v164 = vunpack.c.l.b16 %v109
    %v165 = vunpack.c.h.b16 %v109
    %v166 = vunpack.c.l.b16 %v110
    %v167 = vunpack.c.h.b16 %v110
    %v168 = vunpack.c.l.b16 %v111
    %v169 = vunpack.c.h.b16 %v111
    %v170 = vunpack.c.l.b16 %v112
    %v171 = vunpack.c.h.b16 %v112
    %v172 = vunpack.c.l.b16 %v113
    %v173 = vunpack.c.h.b16 %v113
    %v174 = vunpack.c.l.b16 %v114
    %v175 = vunpack.c.h.b16 %v114
    %v176 = vunpack.c.l.b16 %v115
    %v177 = vunpack.c.h.b16 %v115
    %v178 = vunpack.c.l.b16 %v116
    %v179 = vunpack.c.h.b16 %v116
    %v180 = vunpack.c.l.b16 %v117
    %v181 = vunpack.c.h.b16 %v117
    %v182 = vunpack.c.l.b16 %v118
    %v183 = vunpack.c.h.b16 %v118
    %v184 = vunpack.c.l.b16 %v119
    %v185 = vunpack.c.h.b16 %v119
    %v186 = vunpack.c.l.b16 %v120
    %v187 = vunpack.c.h.b16 %v120
    %v188 = vunpack.c.l.b16 %v121
    %v189 = vunpack.c.h.b16 %v121
    %v190 = vpack.c.b16 %v160, %v154
    %v191 = vpack.c.b16 %v161, %v155
    %v192 = vpack.c.b16 %v162, %v156
    %v193 = vpack.c.b16 %v163, %v157
    %v194 = vpack.c.b16 %v164, %v158
    %v195 = vpack.c.b16 %v165, %v159
    %v196 = vpack.c.b16 %v172, %v166
    %v197 = vpack.c.b16 %v173, %v167
    %v198 = vpack.c.b16 %v174, %v168
    %v199 = vpack.c.b16 %v175, %v169
    %v200 = vpack.c.b16 %v176, %v170
    %v201 = vpack.c.b16 %v177, %v171
    %v202 = vpack.c.b16 %v184, %v178
    %v203 = vpack.c.b16 %v185, %v179
    %v204 = vpack.c.b16 %v186, %v180
    %v205 = vpack.c.b16 %v187, %v181
    %v206 = vpack.c.b16 %v188, %v182
    %v207 = vpack.c.b16 %v189, %v183
    %vm226 = vcmask 392192
    %v228 = vsel %vm226, %v103, 0
    %230 = vmatpush.bf16.msra.mxu0 0
    %231 = vmatpush.bf16.msra.mxu0 0
    %232 = vmatpush.bf16.msra.mxu0 0
    %233 = vmatpush.bf16.msra.mxu0 0
    %234 = vmatpush.bf16.msra.mxu0 0
    %235 = vmatpush.bf16.msra.mxu0 %v202
    %236 = vmatpush.bf16.msra.mxu0 %v196
    %237 = vmatpush.bf16.msra.mxu0 %v190
    %238 = vmatmul.bf16.gmra.mxu0 %v228
    %v239 = vpop.f32.mrf.mxu0
    %v240 = vadd.f32 %v124, %v239
    %v241 = vpop.f32.mrf.mxu0
    %242 = vdwg.mxu0
    %243 = vmatpush.bf16.msra.mxu0 0
    %244 = vmatpush.bf16.msra.mxu0 0
    %245 = vmatpush.bf16.msra.mxu0 0
    %246 = vmatpush.bf16.msra.mxu0 0
    %247 = vmatpush.bf16.msra.mxu0 0
    %248 = vmatpush.bf16.msra.mxu0 %v203
    %249 = vmatpush.bf16.msra.mxu0 %v197
    %250 = vmatpush.bf16.msra.mxu0 %v191
    %251 = vmatmul.bf16.gmra.mxu0 %v228
    %v252 = vpop.f32.mrf.mxu0
    %v253 = vadd.f32 %v125, %v252
    %v254 = vpop.f32.mrf.mxu0
    %255 = vdwg.mxu0
    %256 = vmatpush.bf16.msra.mxu0 0
    %257 = vmatpush.bf16.msra.mxu0 0
    %258 = vmatpush.bf16.msra.mxu0 0
    %259 = vmatpush.bf16.msra.mxu0 0
    %260 = vmatpush.bf16.msra.mxu0 0
    %261 = vmatpush.bf16.msra.mxu0 %v204
    %262 = vmatpush.bf16.msra.mxu0 %v198
    %263 = vmatpush.bf16.msra.mxu0 %v192
    %264 = vmatmul.bf16.gmra.mxu0 %v228
    %v265 = vpop.f32.mrf.mxu0
    %v266 = vadd.f32 %v126, %v265
    %v267 = vpop.f32.mrf.mxu0
    %268 = vdwg.mxu0
    %269 = vmatpush.bf16.msra.mxu0 0
    %270 = vmatpush.bf16.msra.mxu0 0
    %271 = vmatpush.bf16.msra.mxu0 0
    %272 = vmatpush.bf16.msra.mxu0 0
    %273 = vmatpush.bf16.msra.mxu0 0
    %274 = vmatpush.bf16.msra.mxu0 %v205
    %275 = vmatpush.bf16.msra.mxu0 %v199
    %276 = vmatpush.bf16.msra.mxu0 %v193
    %277 = vmatmul.bf16.gmra.mxu0 %v228
    %v278 = vpop.f32.mrf.mxu0
    %v279 = vadd.f32 %v127, %v278
    %v280 = vpop.f32.mrf.mxu0
    %281 = vdwg.mxu0
    %282 = vmatpush.bf16.msra.mxu0 0
    %283 = vmatpush.bf16.msra.mxu0 0
    %284 = vmatpush.bf16.msra.mxu0 0
    %285 = vmatpush.bf16.msra.mxu0 0
    %286 = vmatpush.bf16.msra.mxu0 0
    %287 = vmatpush.bf16.msra.mxu0 %v206
    %288 = vmatpush.bf16.msra.mxu0 %v200
    %289 = vmatpush.bf16.msra.mxu0 %v194
    %290 = vmatmul.bf16.gmra.mxu0 %v228
    %v291 = vpop.f32.mrf.mxu0
    %v292 = vadd.f32 %v128, %v291
    %v293 = vpop.f32.mrf.mxu0
    %294 = vdwg.mxu0
    %295 = vmatpush.bf16.msra.mxu0 0
    %296 = vmatpush.bf16.msra.mxu0 0
    %297 = vmatpush.bf16.msra.mxu0 0
    %298 = vmatpush.bf16.msra.mxu0 0
    %299 = vmatpush.bf16.msra.mxu0 0
    %300 = vmatpush.bf16.msra.mxu0 %v207
    %301 = vmatpush.bf16.msra.mxu0 %v201
    %302 = vmatpush.bf16.msra.mxu0 %v195
    %303 = vmatmul.bf16.gmra.mxu0 %v228
    %v304 = vpop.f32.mrf.mxu0
    %v305 = vadd.f32 %v129, %v304
    %v306 = vpop.f32.mrf.mxu0
    %307 = vdwg.mxu0
    %v308 = vmax.f32 %v240, 0.0
    %v309 = vmax.f32 %v253, 0.0
    %v310 = vmax.f32 %v266, 0.0
    %v311 = vmax.f32 %v279, 0.0
    %v312 = vmax.f32 %v292, 0.0
    %v313 = vmax.f32 %v305, 0.0
    %v314 = vpack.c.bf16 %v308, %v308
    %v315 = vpack.c.bf16 %v309, %v309
    %v316 = vpack.c.bf16 %v310, %v310
    %v317 = vpack.c.bf16 %v311, %v311
    %v318 = vpack.c.bf16 %v312, %v312
    %v319 = vpack.c.bf16 %v313, %v313
    %v320 = vld [vmem:[#allocation8] sm:$0xf]
    %v321 = vld [vmem:[#allocation8 + $0x4] sm:$0xf]
    %v322 = vld [vmem:[#allocation8 + $0x8] sm:$0xf]
    %v323 = vld [vmem:[#allocation8 + $0xc] sm:$0xf]
    %v324 = vld [vmem:[#allocation8 + $0x10] sm:$0xf]
    %v325 = vld [vmem:[#allocation8 + $0x14] sm:$0xf]
    %v326 = vld [vmem:[#allocation8 + $0x18] sm:$0xf]
    %v327 = vld [vmem:[#allocation8 + $0x1c] sm:$0xf]
    %v328 = vld [vmem:[#allocation8 + $0x20] sm:$0xf]
    %v329 = vld [vmem:[#allocation8 + $0x24] sm:$0xf]
    %v330 = vld [vmem:[#allocation8 + $0x28] sm:$0xf]
    %v331 = vld [vmem:[#allocation8 + $0x2c] sm:$0xf]
    %v332 = vld [vmem:[#allocation8 + $0x30] sm:$0xf]
    %v333 = vld [vmem:[#allocation8 + $0x34] sm:$0xf]
    %v334 = vld [vmem:[#allocation8 + $0x38] sm:$0xf]
    %v335 = vld [vmem:[#allocation8 + $0x3c] sm:$0xf]
    %v336 = vld [vmem:[#allocation8 + $0x40] sm:$0xf]
    %v337 = vld [vmem:[#allocation8 + $0x44] sm:$0xf]
    %v338 = vld [vmem:[#allocation8 + $0x48] sm:$0xf]
    %v339 = vld [vmem:[#allocation8 + $0x4c] sm:$0xf]
    %v340 = vld [vmem:[#allocation8 + $0x50] sm:$0xf]
    %v341 = vld [vmem:[#allocation8 + $0x54] sm:$0xf]
    %v342 = vld [vmem:[#allocation8 + $0x58] sm:$0xf]
    %v343 = vld [vmem:[#allocation8 + $0x5c] sm:$0xf]
    %v344 = vld [vmem:[#allocation8 + $0x60] sm:$0xf]
    %v345 = vld [vmem:[#allocation8 + $0x64] sm:$0xf]
    %v346 = vld [vmem:[#allocation8 + $0x68] sm:$0xf]
    %v347 = vld [vmem:[#allocation8 + $0x6c] sm:$0xf]
    %v348 = vld [vmem:[#allocation8 + $0x70] sm:$0xf]
    %v349 = vld [vmem:[#allocation8 + $0x74] sm:$0xf]
    %v350 = vld [vmem:[#allocation8 + $0x78] sm:$0xf]
    %v351 = vld [vmem:[#allocation8 + $0x7c] sm:$0xf]
    %v352 = vld [vmem:[#allocation8 + $0x80] sm:$0xf]
    %v353 = vld [vmem:[#allocation8 + $0x84] sm:$0xf]
    %v354 = vld [vmem:[#allocation8 + $0x88] sm:$0xf]
    %v355 = vld [vmem:[#allocation8 + $0x8c] sm:$0xf]
    %v356 = vld [vmem:[#allocation8 + $0x90] sm:$0xf]
    %v357 = vld [vmem:[#allocation8 + $0x94] sm:$0xf]
    %v358 = vld [vmem:[#allocation8 + $0x98] sm:$0xf]
    %v359 = vld [vmem:[#allocation8 + $0x9c] sm:$0xf]
    %v360 = vld [vmem:[#allocation8 + $0xa0] sm:$0xf]
    %v361 = vld [vmem:[#allocation8 + $0xa4] sm:$0xf]
    %v362 = vld [vmem:[#allocation8 + $0xa8] sm:$0xf]
    %v363 = vld [vmem:[#allocation8 + $0xac] sm:$0xf]
    %v364 = vld [vmem:[#allocation8 + $0xb0] sm:$0xf]
    %v365 = vld [vmem:[#allocation8 + $0xb4] sm:$0xf]
    %v366 = vld [vmem:[#allocation8 + $0xb8] sm:$0xf]
    %v367 = vld [vmem:[#allocation8 + $0xbc] sm:$0xf]
    %v368 = vld [vmem:[#allocation8 + $0xc0] sm:$0xf]
    %v369 = vld [vmem:[#allocation8 + $0xc4] sm:$0xf]
    %v370 = vld [vmem:[#allocation8 + $0xc8] sm:$0xf]
    %v371 = vld [vmem:[#allocation8 + $0xcc] sm:$0xf]
    %v372 = vld [vmem:[#allocation8 + $0xd0] sm:$0xf]
    %v373 = vld [vmem:[#allocation8 + $0xd4] sm:$0xf]
    %v374 = vld [vmem:[#allocation8 + $0xd8] sm:$0xf]
    %v375 = vld [vmem:[#allocation8 + $0xdc] sm:$0xf]
    %v376 = vld [vmem:[#allocation8 + $0xe0] sm:$0xf]
    %v377 = vld [vmem:[#allocation8 + $0xe4] sm:$0xf]
    %v378 = vld [vmem:[#allocation8 + $0xe8] sm:$0xf]
    %v379 = vld [vmem:[#allocation8 + $0xec] sm:$0xf]
    %v380 = vld [vmem:[#allocation8 + $0xf0] sm:$0xf]
    %v381 = vld [vmem:[#allocation8 + $0xf4] sm:$0xf]
    %v382 = vld [vmem:[#allocation8 + $0xf8] sm:$0xf]
    %v383 = vld [vmem:[#allocation8 + $0xfc] sm:$0xf]
    %v384 = vld [vmem:[#allocation8 + $0x100] sm:$0xf]
    %v385 = vld [vmem:[#allocation8 + $0x104] sm:$0xf]
    %v386 = vld [vmem:[#allocation8 + $0x108] sm:$0xf]
    %v387 = vld [vmem:[#allocation8 + $0x10c] sm:$0xf]
    %v388 = vld [vmem:[#allocation8 + $0x110] sm:$0xf]
    %v389 = vld [vmem:[#allocation8 + $0x114] sm:$0xf]
    %v390 = vld [vmem:[#allocation8 + $0x118] sm:$0xf]
    %v391 = vld [vmem:[#allocation8 + $0x11c] sm:$0xf]
    %v392 = vld [vmem:[#allocation8 + $0x120] sm:$0xf]
    %v393 = vld [vmem:[#allocation8 + $0x124] sm:$0xf]
    %v394 = vld [vmem:[#allocation8 + $0x128] sm:$0xf]
    %v395 = vld [vmem:[#allocation8 + $0x12c] sm:$0xf]
    %v396 = vld [vmem:[#allocation8 + $0x130] sm:$0xf]
    %v397 = vld [vmem:[#allocation8 + $0x134] sm:$0xf]
    %v398 = vld [vmem:[#allocation8 + $0x138] sm:$0xf]
    %v399 = vld [vmem:[#allocation8 + $0x13c] sm:$0xf]
    %v400 = vld [vmem:[#allocation8 + $0x140] sm:$0xf]
    %v401 = vld [vmem:[#allocation8 + $0x144] sm:$0xf]
    %v402 = vld [vmem:[#allocation8 + $0x148] sm:$0xf]
    %v403 = vld [vmem:[#allocation8 + $0x14c] sm:$0xf]
    %v404 = vld [vmem:[#allocation8 + $0x150] sm:$0xf]
    %v405 = vld [vmem:[#allocation8 + $0x154] sm:$0xf]
    %v406 = vld [vmem:[#allocation8 + $0x158] sm:$0xf]
    %v407 = vld [vmem:[#allocation8 + $0x15c] sm:$0xf]
    %v408 = vld [vmem:[#allocation8 + $0x160] sm:$0xf]
    %v409 = vld [vmem:[#allocation8 + $0x164] sm:$0xf]
    %v410 = vld [vmem:[#allocation8 + $0x168] sm:$0xf]
    %v411 = vld [vmem:[#allocation8 + $0x16c] sm:$0xf]
    %v412 = vld [vmem:[#allocation8 + $0x170] sm:$0xf]
    %v413 = vld [vmem:[#allocation8 + $0x174] sm:$0xf]
    %v414 = vld [vmem:[#allocation8 + $0x178] sm:$0xf]
    %v415 = vld [vmem:[#allocation8 + $0x17c] sm:$0xf]
    %v416 = vld [vmem:[%s4] sm:$0x1]
    %v418 = vperm.slane %v416, 0
    %v516 = vunpack.c.l.b16 %v320
    %v517 = vunpack.c.l.b16 %v321
    %v518 = vunpack.c.l.b16 %v322
    %v519 = vunpack.c.l.b16 %v323
    %v520 = vunpack.c.l.b16 %v324
    %v521 = vunpack.c.l.b16 %v325
    %v522 = vunpack.c.l.b16 %v326
    %v523 = vunpack.c.l.b16 %v327
    %v524 = vunpack.c.l.b16 %v328
    %v525 = vunpack.c.l.b16 %v329
    %v526 = vunpack.c.l.b16 %v330
    %v527 = vunpack.c.l.b16 %v331
    %v528 = vunpack.c.l.b16 %v332
    %v529 = vunpack.c.l.b16 %v333
    %v530 = vunpack.c.l.b16 %v334
    %v531 = vunpack.c.l.b16 %v335
    %v532 = vunpack.c.l.b16 %v336
    %v533 = vunpack.c.l.b16 %v337
    %v534 = vunpack.c.l.b16 %v338
    %v535 = vunpack.c.l.b16 %v339
    %v536 = vunpack.c.l.b16 %v340
    %v537 = vunpack.c.l.b16 %v341
    %v538 = vunpack.c.l.b16 %v342
    %v539 = vunpack.c.l.b16 %v343
    %v540 = vunpack.c.l.b16 %v344
    %v541 = vunpack.c.l.b16 %v345
    %v542 = vunpack.c.l.b16 %v346
    %v543 = vunpack.c.l.b16 %v347
    %v544 = vunpack.c.l.b16 %v348
    %v545 = vunpack.c.l.b16 %v349
    %v546 = vunpack.c.l.b16 %v350
    %v547 = vunpack.c.l.b16 %v351
    %v548 = vunpack.c.l.b16 %v352
    %v549 = vunpack.c.l.b16 %v353
    %v550 = vunpack.c.l.b16 %v354
    %v551 = vunpack.c.l.b16 %v355
    %v552 = vunpack.c.l.b16 %v356
    %v553 = vunpack.c.l.b16 %v357
    %v554 = vunpack.c.l.b16 %v358
    %v555 = vunpack.c.l.b16 %v359
    %v556 = vunpack.c.l.b16 %v360
    %v557 = vunpack.c.l.b16 %v361
    %v558 = vunpack.c.l.b16 %v362
    %v559 = vunpack.c.l.b16 %v363
    %v560 = vunpack.c.l.b16 %v364
    %v561 = vunpack.c.l.b16 %v365
    %v562 = vunpack.c.l.b16 %v366
    %v563 = vunpack.c.l.b16 %v367
    %v564 = vunpack.c.l.b16 %v368
    %v565 = vunpack.c.l.b16 %v369
    %v566 = vunpack.c.l.b16 %v370
    %v567 = vunpack.c.l.b16 %v371
    %v568 = vunpack.c.l.b16 %v372
    %v569 = vunpack.c.l.b16 %v373
    %v570 = vunpack.c.l.b16 %v374
    %v571 = vunpack.c.l.b16 %v375
    %v572 = vunpack.c.l.b16 %v376
    %v573 = vunpack.c.l.b16 %v377
    %v574 = vunpack.c.l.b16 %v378
    %v575 = vunpack.c.l.b16 %v379
    %v576 = vunpack.c.l.b16 %v380
    %v577 = vunpack.c.l.b16 %v381
    %v578 = vunpack.c.l.b16 %v382
    %v579 = vunpack.c.l.b16 %v383
    %v580 = vunpack.c.l.b16 %v384
    %v581 = vunpack.c.l.b16 %v385
    %v582 = vunpack.c.l.b16 %v386
    %v583 = vunpack.c.l.b16 %v387
    %v584 = vunpack.c.l.b16 %v388
    %v585 = vunpack.c.l.b16 %v389
    %v586 = vunpack.c.l.b16 %v390
    %v587 = vunpack.c.l.b16 %v391
    %v588 = vunpack.c.l.b16 %v392
    %v589 = vunpack.c.l.b16 %v393
    %v590 = vunpack.c.l.b16 %v394
    %v591 = vunpack.c.l.b16 %v395
    %v592 = vunpack.c.l.b16 %v396
    %v593 = vunpack.c.l.b16 %v397
    %v594 = vunpack.c.l.b16 %v398
    %v595 = vunpack.c.l.b16 %v399
    %v596 = vunpack.c.l.b16 %v400
    %v597 = vunpack.c.l.b16 %v401
    %v598 = vunpack.c.l.b16 %v402
    %v599 = vunpack.c.l.b16 %v403
    %v600 = vunpack.c.l.b16 %v404
    %v601 = vunpack.c.l.b16 %v405
    %v602 = vunpack.c.l.b16 %v406
    %v603 = vunpack.c.l.b16 %v407
    %v604 = vunpack.c.l.b16 %v408
    %v605 = vunpack.c.l.b16 %v409
    %v606 = vunpack.c.l.b16 %v410
    %v607 = vunpack.c.l.b16 %v411
    %v608 = vunpack.c.l.b16 %v412
    %v609 = vunpack.c.l.b16 %v413
    %v610 = vunpack.c.l.b16 %v414
    %v611 = vunpack.c.l.b16 %v415
    %v612 = vpack.c.b16 %v517, %v516
    %v613 = vpack.c.b16 %v519, %v518
    %v614 = vpack.c.b16 %v521, %v520
    %v615 = vpack.c.b16 %v523, %v522
    %v616 = vpack.c.b16 %v525, %v524
    %v617 = vpack.c.b16 %v527, %v526
    %v618 = vpack.c.b16 %v529, %v528
    %v619 = vpack.c.b16 %v531, %v530
    %v620 = vpack.c.b16 %v533, %v532
    %v621 = vpack.c.b16 %v535, %v534
    %v622 = vpack.c.b16 %v537, %v536
    %v623 = vpack.c.b16 %v539, %v538
    %v624 = vpack.c.b16 %v541, %v540
    %v625 = vpack.c.b16 %v543, %v542
    %v626 = vpack.c.b16 %v545, %v544
    %v627 = vpack.c.b16 %v547, %v546
    %v628 = vpack.c.b16 %v549, %v548
    %v629 = vpack.c.b16 %v551, %v550
    %v630 = vpack.c.b16 %v553, %v552
    %v631 = vpack.c.b16 %v555, %v554
    %v632 = vpack.c.b16 %v557, %v556
    %v633 = vpack.c.b16 %v559, %v558
    %v634 = vpack.c.b16 %v561, %v560
    %v635 = vpack.c.b16 %v563, %v562
    %v636 = vpack.c.b16 %v565, %v564
    %v637 = vpack.c.b16 %v567, %v566
    %v638 = vpack.c.b16 %v569, %v568
    %v639 = vpack.c.b16 %v571, %v570
    %v640 = vpack.c.b16 %v573, %v572
    %v641 = vpack.c.b16 %v575, %v574
    %v642 = vpack.c.b16 %v577, %v576
    %v643 = vpack.c.b16 %v579, %v578
    %v644 = vpack.c.b16 %v581, %v580
    %v645 = vpack.c.b16 %v583, %v582
    %v646 = vpack.c.b16 %v585, %v584
    %v647 = vpack.c.b16 %v587, %v586
    %v648 = vpack.c.b16 %v589, %v588
    %v649 = vpack.c.b16 %v591, %v590
    %v650 = vpack.c.b16 %v593, %v592
    %v651 = vpack.c.b16 %v595, %v594
    %v652 = vpack.c.b16 %v597, %v596
    %v653 = vpack.c.b16 %v599, %v598
    %v654 = vpack.c.b16 %v601, %v600
    %v655 = vpack.c.b16 %v603, %v602
    %v656 = vpack.c.b16 %v605, %v604
    %v657 = vpack.c.b16 %v607, %v606
    %v658 = vpack.c.b16 %v609, %v608
    %v659 = vpack.c.b16 %v611, %v610
    %708 = vmatpush.bf16.msra.mxu0 %v619
    %709 = vmatpush.bf16.msra.mxu0 %v618
    %710 = vmatpush.bf16.msra.mxu0 %v617
    %711 = vmatpush.bf16.msra.mxu0 %v616
    %712 = vmatpush.bf16.msra.mxu0 %v615
    %713 = vmatpush.bf16.msra.mxu0 %v614
    %714 = vmatpush.bf16.msra.mxu0 %v613
    %715 = vmatpush.bf16.msra.mxu0 %v612
    %716 = vmatmul.bf16.gmra.mxu0 %v314
    %v717 = vpop.f32.mrf.mxu0
    %v718 = vadd.f32 %v418, %v717
    %v719 = vpop.f32.mrf.mxu0
    %720 = vdwg.mxu0
    %721 = vmatpush.bf16.msra.mxu0 %v627
    %722 = vmatpush.bf16.msra.mxu0 %v626
    %723 = vmatpush.bf16.msra.mxu0 %v625
    %724 = vmatpush.bf16.msra.mxu0 %v624
    %725 = vmatpush.bf16.msra.mxu0 %v623
    %726 = vmatpush.bf16.msra.mxu0 %v622
    %727 = vmatpush.bf16.msra.mxu0 %v621
    %728 = vmatpush.bf16.msra.mxu0 %v620
    %729 = vmatmul.bf16.gmra.mxu0 %v315
    %v730 = vpop.f32.mrf.mxu0
    %v731 = vadd.f32 %v718, %v730
    %v732 = vpop.f32.mrf.mxu0
    %733 = vdwg.mxu0
    %734 = vmatpush.bf16.msra.mxu0 %v635
    %735 = vmatpush.bf16.msra.mxu0 %v634
    %736 = vmatpush.bf16.msra.mxu0 %v633
    %737 = vmatpush.bf16.msra.mxu0 %v632
    %738 = vmatpush.bf16.msra.mxu0 %v631
    %739 = vmatpush.bf16.msra.mxu0 %v630
    %740 = vmatpush.bf16.msra.mxu0 %v629
    %741 = vmatpush.bf16.msra.mxu0 %v628
    %742 = vmatmul.bf16.gmra.mxu0 %v316
    %v743 = vpop.f32.mrf.mxu0
    %v744 = vadd.f32 %v731, %v743
    %v745 = vpop.f32.mrf.mxu0
    %746 = vdwg.mxu0
    %747 = vmatpush.bf16.msra.mxu0 %v643
    %748 = vmatpush.bf16.msra.mxu0 %v642
    %749 = vmatpush.bf16.msra.mxu0 %v641
    %750 = vmatpush.bf16.msra.mxu0 %v640
    %751 = vmatpush.bf16.msra.mxu0 %v639
    %752 = vmatpush.bf16.msra.mxu0 %v638
    %753 = vmatpush.bf16.msra.mxu0 %v637
    %754 = vmatpush.bf16.msra.mxu0 %v636
    %755 = vmatmul.bf16.gmra.mxu0 %v317
    %v756 = vpop.f32.mrf.mxu0
    %v757 = vadd.f32 %v744, %v756
    %v758 = vpop.f32.mrf.mxu0
    %759 = vdwg.mxu0
    %760 = vmatpush.bf16.msra.mxu0 %v651
    %761 = vmatpush.bf16.msra.mxu0 %v650
    %762 = vmatpush.bf16.msra.mxu0 %v649
    %763 = vmatpush.bf16.msra.mxu0 %v648
    %764 = vmatpush.bf16.msra.mxu0 %v647
    %765 = vmatpush.bf16.msra.mxu0 %v646
    %766 = vmatpush.bf16.msra.mxu0 %v645
    %767 = vmatpush.bf16.msra.mxu0 %v644
    %768 = vmatmul.bf16.gmra.mxu0 %v318
    %v769 = vpop.f32.mrf.mxu0
    %v770 = vadd.f32 %v757, %v769
    %v771 = vpop.f32.mrf.mxu0
    %772 = vdwg.mxu0
    %773 = vmatpush.bf16.msra.mxu0 %v659
    %774 = vmatpush.bf16.msra.mxu0 %v658
    %775 = vmatpush.bf16.msra.mxu0 %v657
    %776 = vmatpush.bf16.msra.mxu0 %v656
    %777 = vmatpush.bf16.msra.mxu0 %v655
    %778 = vmatpush.bf16.msra.mxu0 %v654
    %779 = vmatpush.bf16.msra.mxu0 %v653
    %780 = vmatpush.bf16.msra.mxu0 %v652
    %781 = vmatmul.bf16.gmra.mxu0 %v319
    %v782 = vpop.f32.mrf.mxu0
    %v783 = vadd.f32 %v770, %v782
    %v784 = vpop.f32.mrf.mxu0
    %785 = vdwg.mxu0
    %v786 = vmax.f32 %v783, 0.0
    %v787 = vpack.c.bf16 %v786, %v786
    %v788 = vld [vmem:[#allocation10] sm:$0xf]
    %v789 = vld [vmem:[#allocation10 + $0x4] sm:$0xf]
    %v790 = vld [vmem:[#allocation10 + $0x8] sm:$0xf]
    %v791 = vld [vmem:[#allocation10 + $0xc] sm:$0xf]
    %v792 = vld [vmem:[#allocation10 + $0x10] sm:$0xf]
    %v793 = vld [vmem:[#allocation10 + $0x14] sm:$0xf]
    %v794 = vld [vmem:[#allocation10 + $0x18] sm:$0xf]
    %v795 = vld [vmem:[#allocation10 + $0x1c] sm:$0xf]
    %v796 = vld [vmem:[#allocation10 + $0x20] sm:$0xf]
    %v797 = vld [vmem:[#allocation10 + $0x24] sm:$0xf]
    %v798 = vld [vmem:[#allocation10 + $0x28] sm:$0xf]
    %v799 = vld [vmem:[#allocation10 + $0x2c] sm:$0xf]
    %v800 = vld [vmem:[#allocation10 + $0x30] sm:$0xf]
    %v801 = vld [vmem:[#allocation10 + $0x34] sm:$0xf]
    %v802 = vld [vmem:[#allocation10 + $0x38] sm:$0xf]
    %v803 = vld [vmem:[#allocation10 + $0x3c] sm:$0xf]
    %v804 = vld [vmem:[%s6] sm:$0x1]
    %v806 = vperm.slane %v804, 0
    %v824 = vunpack.c.l.b16 %v788
    %v825 = vunpack.c.l.b16 %v789
    %v826 = vunpack.c.l.b16 %v790
    %v827 = vunpack.c.l.b16 %v791
    %v828 = vunpack.c.l.b16 %v792
    %v829 = vunpack.c.l.b16 %v793
    %v830 = vunpack.c.l.b16 %v794
    %v831 = vunpack.c.l.b16 %v795
    %v832 = vunpack.c.l.b16 %v796
    %v833 = vunpack.c.l.b16 %v797
    %v834 = vunpack.c.l.b16 %v798
    %v835 = vunpack.c.l.b16 %v799
    %v836 = vunpack.c.l.b16 %v800
    %v837 = vunpack.c.l.b16 %v801
    %v838 = vunpack.c.l.b16 %v802
    %v839 = vunpack.c.l.b16 %v803
    %v840 = vpack.c.b16 %v825, %v824
    %v841 = vpack.c.b16 %v827, %v826
    %v842 = vpack.c.b16 %v829, %v828
    %v843 = vpack.c.b16 %v831, %v830
    %v844 = vpack.c.b16 %v833, %v832
    %v845 = vpack.c.b16 %v835, %v834
    %v846 = vpack.c.b16 %v837, %v836
    %v847 = vpack.c.b16 %v839, %v838
    %856 = vmatpush.bf16.msra.mxu0 %v847
    %857 = vmatpush.bf16.msra.mxu0 %v846
    %858 = vmatpush.bf16.msra.mxu0 %v845
    %859 = vmatpush.bf16.msra.mxu0 %v844
    %860 = vmatpush.bf16.msra.mxu0 %v843
    %861 = vmatpush.bf16.msra.mxu0 %v842
    %862 = vmatpush.bf16.msra.mxu0 %v841
    %863 = vmatpush.bf16.msra.mxu0 %v840
    %864 = vmatmul.bf16.gmra.mxu0 %v787
    %v865 = vpop.f32.mrf.mxu0
    %v866 = vadd.f32 %v806, %v865
    %v867 = vpop.f32.mrf.mxu0
    %868 = vdwg.mxu0
    %869 = vmax.xlane.f32.xlu0 %v866
    %v870 = vpop.xlane.xlu0 %869
    %v871 = vsub.f32 %v866, %v870
    %v872 = vmul.f32 %v871, 1.442695
    %v873 = vpow.pop %v872
    %874 = vadd.xlane.f32.xlu0 %v873
    %v875 = vpop.xlane.xlu0 %874
    %v876 = vrcp.pop %v875
    %v877 = vmul.f32 %v875, %v876
    %v878 = vsub.f32 1.0, %v877
    %v879 = vmul.f32 %v876, %v878
    %v880 = vadd.f32 %v876, %v879
    %vm881 = vweird.f32 %v875
    %vm882 = vweird.f32 %v876
    %vm883 = vmor %vm881, %vm882
    %v884 = vsel %vm883, %v876, %v880
    %v885 = vand.u32 2147483647, %v875
    %vm886 = vcmp.eq.f32.partialorder %v885, 8.507059e+37
    %v887 = vand.u32 %v875, 2147483648
    %v888 = vor.u32 1.1754944e-38, %v887
    %v889 = vsel %vm886, %v888, %v884
    %v890 = vmul.f32 %v873, %v889
    %891 = vst [vmem:[#allocation11] sm:$0xff] %v890
    // Predicated region
    $region50: #{tpu_custom_call.1} parent=1 // pred_check
      _
    $region51: #{tpu_custom_call.1} parent=1 // pred_check_branch
      %893 = sbr.rel (0) target = $region53
    $region52: #{tpu_custom_call.1} parent=1 // pred_region
      %895 = vsyncadd [#allocation4], 0
      %s897 = sshll.u32 [#allocation11], 4
      %s898 = int_to_ptr.vmem [resolvable:$true] %s897
      %s899 = sshll.u32 %s7, 4
      %s900 = int_to_ptr.hbm [resolvable:$true] %s899
      %902 = dma.vmem_to_hbm [thread:$0]  %s898, 128, %s900, [#allocation4]
    $region53: #{tpu_custom_call.1} parent=1 // pred_fallthru
      _
    // Predicated region
    $region54: #{tpu_custom_call.1} parent=1 // pred_check
      _
    $region55: #{tpu_custom_call.1} parent=1 // pred_check_branch
      %904 = sbr.rel (0) target = $region57
    $region56: #{tpu_custom_call.1} parent=1 // pred_region
      %906 = dma.done [#allocation4], 128
    $region57: #{tpu_custom_call.1} parent=1 // pred_fallthru
      _
    %907 = vsyncpa [#allocation3], 1
    %908 = vsyncpa [#allocation6], 1
    %909 = vsyncpa [#allocation9], 1
    %910 = vsyncpa [#allocation4], 1

</llo_original>
